<compile_context>
chip_gen: v7x
topology: tpu7x:2x2x1
jax: 0.10.0
libtpu: 0.0.40
codegen_flags: <defaults>
</compile_context>

<pallas_src>
import jax
import jax.numpy as jnp
from jax import lax
from jax.experimental import pallas as pl
from jax.experimental.pallas import tpu as pltpu

LANES = 128


def _device_defaults():
    """(max block rows, is_v7x) tuned per TPU generation, safe fallback."""
    try:
        kind = jax.devices()[0].device_kind.lower()
    except Exception:
        kind = ""
    is_v7 = "v7" in kind
    is_v5e = ("v5e" in kind) or ("v5 lite" in kind) or ("v5litepod" in kind)
    # v5e: 16 MiB default scoped VMEM -> 4096 rows (8 MiB double-buffered).
    # v6e/v7x (and others): 8192 rows (16 MiB double-buffered), limit raised
    # explicitly below.
    max_rows = 4096 if is_v5e else 8192
    return max_rows, is_v7


def _make_relmse_kernel(rows_all, block_rows, inner):
    """Kernel factory; rows_all / block_rows / inner are static Python ints."""
    needs_mask = (rows_all % block_rows) != 0

    def kernel(pred_ref, true_ref, out_ref, num_acc, den_acc):
        i = pl.program_id(0)
        k = pl.program_id(1)

        @pl.when(k == 0)
        def _():
            num_acc[...] = jnp.zeros_like(num_acc)
            den_acc[...] = jnp.zeros_like(den_acc)

        p = pred_ref[...].astype(jnp.float32)
        t = true_ref[...].astype(jnp.float32)

        if needs_mask:
            # Zero out rows beyond the (static) number of valid rows; only the
            # globally last block is actually partial, everything else passes
            # the compare. Masking is pure VPU filler under the HBM roofline.
            blk = i * inner + k
            row = lax.broadcasted_iota(jnp.int32, (block_rows, LANES), 0)
            valid = (blk * block_rows + row) < rows_all
            p = jnp.where(valid, p, 0.0)
            t = jnp.where(valid, t, 0.0)

        d = p - t
        # Sublane-reduce each block into the tiny (1, 128) accumulators:
        # no big accumulator loads/stores per vreg, no long final-step drain.
        num_acc[...] += jnp.sum(d * d, axis=0, keepdims=True)
        den_acc[...] += jnp.sum(t * t, axis=0, keepdims=True)

        @pl.when(k == pl.num_programs(1) - 1)
        def _():
            nsum = jnp.sum(num_acc[...])
            dsum = jnp.sum(den_acc[...])
            lane = lax.broadcasted_iota(jnp.int32, (1, LANES), 1)
            # lane 0 -> numerator partial, lane 1 -> denominator partial.
            out_ref[...] = jnp.where(lane == 0, nsum,
                                     jnp.where(lane == 1, dsum, 0.0))

    return kernel


def relative_mse_loss(pred, true):
    """Pallas TPU implementation of RelativeMSELoss.forward (any shape)."""
    assert pred.shape == true.shape, "pred and true must have the same shape"

    p_flat = jnp.ravel(pred)
    t_flat = jnp.ravel(true)
    n = p_flat.shape[0]
    rows_all = n // LANES

    itemsize = min(jnp.dtype(pred.dtype).itemsize, jnp.dtype(true.dtype).itemsize)
    # Sublane packing: f32 -> 8, bf16 -> 16, 8-bit -> 32 row alignment.
    align = max(8, 32 // itemsize)

    max_rows, is_v7 = _device_defaults()
    block_rows = min(max_rows, (rows_all // align) * align)

    if block_rows == 0:
        # Fewer than one aligned tile: plain JAX.
        p32 = p_flat.astype(jnp.float32)
        t32 = t_flat.astype(jnp.float32)
        return jnp.sum(jnp.square(p32 - t32)) / jnp.sum(jnp.square(t32))

    nblocks = pl.cdiv(rows_all, block_rows)
    # 2-way split only feeds the two v7x TensorCores; keep 1 elsewhere and
    # whenever an odd block count would unbalance the splits.
    num_splits = 2 if (is_v7 and nblocks >= 2 and nblocks % 2 == 0) else 1
    inner = nblocks // num_splits

    # Lane-dense 2D view of the flattened inputs (zero-copy reshape when
    # n % 128 == 0; otherwise only the ragged <128-element tail is sliced off).
    if n % LANES == 0:
        p2d = p_flat.reshape(rows_all, LANES)
        t2d = t_flat.reshape(rows_all, LANES)
    else:
        p2d = p_flat[: rows_all * LANES].reshape(rows_all, LANES)
        t2d = t_flat[: rows_all * LANES].reshape(rows_all, LANES)

    kernel = _make_relmse_kernel(rows_all, block_rows, inner)

    # 2 inputs x 2 pipeline buffers.
    footprint = 2 * 2 * block_rows * LANES * itemsize
    vmem_limit = None
    if footprint > 12 * 1024 * 1024:
        vmem_limit = min(footprint + 16 * 1024 * 1024, 48 * 1024 * 1024)

    kern_elems = rows_all * LANES
    cost = pl.CostEstimate(
        flops=5 * kern_elems,
        transcendentals=0,
        bytes_accessed=kern_elems * (jnp.dtype(pred.dtype).itemsize
                                     + jnp.dtype(true.dtype).itemsize)
        + num_splits * LANES * 4,
    )

    partials = pl.pallas_call(
        kernel,
        out_shape=jax.ShapeDtypeStruct((1, num_splits * LANES), jnp.float32),
        grid=(num_splits, inner),
        in_specs=[
            pl.BlockSpec((block_rows, LANES), lambda i, k: (i * inner + k, 0)),
            pl.BlockSpec((block_rows, LANES), lambda i, k: (i * inner + k, 0)),
        ],
        out_specs=pl.BlockSpec((1, LANES), lambda i, k: (0, i)),
        scratch_shapes=[
            pltpu.VMEM((1, LANES), jnp.float32),
            pltpu.VMEM((1, LANES), jnp.float32),
        ],
        compiler_params=pltpu.CompilerParams(
            dimension_semantics=("parallel", "arbitrary"),
            vmem_limit_bytes=vmem_limit,
        ),
        cost_estimate=cost,
    )(p2d, t2d)

    parts = partials.reshape(num_splits, LANES)
    num = jnp.sum(parts[:, 0])
    den = jnp.sum(parts[:, 1])

    # <128-element ragged tail (if any) in plain JAX — negligible.
    tail_start = rows_all * LANES
    if tail_start < n:
        tp = p_flat[tail_start:].astype(jnp.float32)
        tt = t_flat[tail_start:].astype(jnp.float32)
        td = tp - tt
        num = num + jnp.sum(td * td)
        den = den + jnp.sum(tt * tt)

    # NOTE: an all-zero `true` yields inf/nan, matching the PyTorch reference.
    return num / den


def _reference(pred, true):
    p = pred.astype(jnp.float32)
    t = true.astype(jnp.float32)
    return jnp.mean(jnp.square(p - t)) / jnp.mean(jnp.square(t))


if __name__ == "__main__":
    key = jax.random.PRNGKey(0)
    k1, k2, k3, k4 = jax.random.split(key, 4)

    # Small NCHW-like shapes consistent with the module's usage.
    pred = jax.random.normal(k1, (2, 4, 16, 16), dtype=jnp.float32)
    true = jax.random.normal(k2, (2, 4, 16, 16), dtype=jnp.float32) + 0.5

    loss = jax.block_until_ready(relative_mse_loss(pred, true))
    ref = _reference(pred, true)
    assert jnp.allclose(loss, ref, rtol=1e-5, atol=1e-6), (float(loss), float(ref))

    # Ragged shape: exercises the in-kernel partial-block mask + JAX tail.
    pred_r = jax.random.normal(k3, (3, 5, 17, 11), dtype=jnp.float32)
    true_r = jax.random.normal(k4, (3, 5, 17, 11), dtype=jnp.float32) + 0.5

    loss_r = jax.block_until_ready(relative_mse_loss(pred_r, true_r))
    ref_r = _reference(pred_r, true_r)
    assert jnp.allclose(loss_r, ref_r, rtol=1e-5, atol=1e-6), (float(loss_r), float(ref_r))

    print("KERNEL_OK")
</pallas_src>

<mosaic_0001>
module attributes {stable_mosaic.version = 11 : i64} {
  func.func @kernel(%arg0: i32, %arg1: i32, %arg2: memref<16x128xf32, #tpu.memory_space<vmem>>, %arg3: memref<16x128xf32, #tpu.memory_space<vmem>>, %arg4: memref<1x128xf32, #tpu.memory_space<vmem>>, %arg5: memref<1x128xf32, #tpu.memory_space<vmem>>, %arg6: memref<1x128xf32, #tpu.memory_space<vmem>>) attributes {dimension_semantics = [#tpu.dimension_semantics<parallel>, #tpu.dimension_semantics<arbitrary>], iteration_bounds = array<i64: 1, 1>, scalar_prefetch = 0 : i64, scratch_operands = 2 : i64, tpu.core_type = #tpu.core_type<tc>, window_params = [{transform_indices = @transform_0, window_bounds = array<i64: 16, 128>}, {transform_indices = @transform_1, window_bounds = array<i64: 16, 128>}, {transform_indices = @transform_2, window_bounds = array<i64: 1, 128>}]} {
    %c0_i32 = arith.constant 0 : i32
    %0 = arith.cmpi eq, %arg1, %c0_i32 : i32
    %1 = arith.extui %0 : i1 to i32
    %c0_i32_0 = arith.constant 0 : i32
    %2 = arith.cmpi ne, %1, %c0_i32_0 : i32
    scf.if %2 {
      %cst_15 = arith.constant 0.000000e+00 : f32
      %21 = vector.broadcast %cst_15 : f32 to vector<1x128xf32>
      %c0_16 = arith.constant 0 : index
      %c0_17 = arith.constant 0 : index
      %22 = vector.load %arg5[%c0_16, %c0_17] : memref<1x128xf32, #tpu.memory_space<vmem>>, vector<1x128xf32>
      tpu.vector_store %arg5[%c0_16, %c0_17], %21 {strides = array<i32>} : memref<1x128xf32, #tpu.memory_space<vmem>>, vector<1x128xf32>,
      %cst_18 = arith.constant 0.000000e+00 : f32
      %23 = vector.broadcast %cst_18 : f32 to vector<1x128xf32>
      %c0_19 = arith.constant 0 : index
      %c0_20 = arith.constant 0 : index
      %24 = vector.load %arg6[%c0_19, %c0_20] : memref<1x128xf32, #tpu.memory_space<vmem>>, vector<1x128xf32>
      tpu.vector_store %arg6[%c0_19, %c0_20], %23 {strides = array<i32>} : memref<1x128xf32, #tpu.memory_space<vmem>>, vector<1x128xf32>,
    } else {
    }
    %c0 = arith.constant 0 : index
    %c0_1 = arith.constant 0 : index
    %3 = vector.load %arg2[%c0, %c0_1] : memref<16x128xf32, #tpu.memory_space<vmem>>, vector<16x128xf32>
    %c0_2 = arith.constant 0 : index
    %c0_3 = arith.constant 0 : index
    %4 = vector.load %arg3[%c0_2, %c0_3] : memref<16x128xf32, #tpu.memory_space<vmem>>, vector<16x128xf32>
    %5 = arith.subf %3, %4 : vector<16x128xf32>
    %c0_4 = arith.constant 0 : index
    %c0_5 = arith.constant 0 : index
    %6 = vector.load %arg5[%c0_4, %c0_5] : memref<1x128xf32, #tpu.memory_space<vmem>>, vector<1x128xf32>
    %7 = arith.mulf %5, %5 : vector<16x128xf32>
    %cst = arith.constant dense<0.000000e+00> : vector<128xf32>
    %8 = vector.multi_reduction <add>, %7, %cst [0] : vector<16x128xf32> to vector<128xf32>
    %9 = vector.shape_cast %8 : vector<128xf32> to vector<1x128xf32>
    %10 = arith.addf %6, %9 : vector<1x128xf32>
    %c0_6 = arith.constant 0 : index
    %c0_7 = arith.constant 0 : index
    %11 = vector.load %arg5[%c0_6, %c0_7] : memref<1x128xf32, #tpu.memory_space<vmem>>, vector<1x128xf32>
    tpu.vector_store %arg5[%c0_6, %c0_7], %10 {strides = array<i32>} : memref<1x128xf32, #tpu.memory_space<vmem>>, vector<1x128xf32>,
    %c0_8 = arith.constant 0 : index
    %c0_9 = arith.constant 0 : index
    %12 = vector.load %arg6[%c0_8, %c0_9] : memref<1x128xf32, #tpu.memory_space<vmem>>, vector<1x128xf32>
    %13 = arith.mulf %4, %4 : vector<16x128xf32>
    %cst_10 = arith.constant dense<0.000000e+00> : vector<128xf32>
    %14 = vector.multi_reduction <add>, %13, %cst_10 [0] : vector<16x128xf32> to vector<128xf32>
    %15 = vector.shape_cast %14 : vector<128xf32> to vector<1x128xf32>
    %16 = arith.addf %12, %15 : vector<1x128xf32>
    %c0_11 = arith.constant 0 : index
    %c0_12 = arith.constant 0 : index
    %17 = vector.load %arg6[%c0_11, %c0_12] : memref<1x128xf32, #tpu.memory_space<vmem>>, vector<1x128xf32>
    tpu.vector_store %arg6[%c0_11, %c0_12], %16 {strides = array<i32>} : memref<1x128xf32, #tpu.memory_space<vmem>>, vector<1x128xf32>,
    %c0_i32_13 = arith.constant 0 : i32
    %18 = arith.cmpi eq, %arg1, %c0_i32_13 : i32
    %19 = arith.extui %18 : i1 to i32
    %c0_i32_14 = arith.constant 0 : i32
    %20 = arith.cmpi ne, %19, %c0_i32_14 : i32
    scf.if %20 {
      %c0_15 = arith.constant 0 : index
      %c0_16 = arith.constant 0 : index
      %21 = vector.load %arg5[%c0_15, %c0_16] : memref<1x128xf32, #tpu.memory_space<vmem>>, vector<1x128xf32>
      %22 = vector.shape_cast %21 : vector<1x128xf32> to vector<1x1x128xf32>
      %cst_17 = arith.constant dense<0.000000e+00> : vector<1xf32>
      %23 = vector.multi_reduction <add>, %22, %cst_17 [1, 2] : vector<1x1x128xf32> to vector<1xf32>
      %24 = vector.shape_cast %23 : vector<1xf32> to vector<1x1x1xf32>
      %25 = vector.extract %24[0, 0, 0] : f32 from vector<1x1x1xf32>
      %c0_18 = arith.constant 0 : index
      %c0_19 = arith.constant 0 : index
      %26 = vector.load %arg6[%c0_18, %c0_19] : memref<1x128xf32, #tpu.memory_space<vmem>>, vector<1x128xf32>
      %27 = vector.shape_cast %26 : vector<1x128xf32> to vector<1x1x128xf32>
      %cst_20 = arith.constant dense<0.000000e+00> : vector<1xf32>
      %28 = vector.multi_reduction <add>, %27, %cst_20 [1, 2] : vector<1x1x128xf32> to vector<1xf32>
      %29 = vector.shape_cast %28 : vector<1xf32> to vector<1x1x1xf32>
      %30 = vector.extract %29[0, 0, 0] : f32 from vector<1x1x1xf32>
      %31 = tpu.iota {dimensions = array<i32: 1>} : vector<1x128xi32>
      %c0_i32_21 = arith.constant 0 : i32
      %32 = vector.broadcast %c0_i32_21 : i32 to vector<1x128xi32>
      %33 = arith.cmpi eq, %31, %32 : vector<1x128xi32>
      %c1_i32 = arith.constant 1 : i32
      %34 = vector.broadcast %c1_i32 : i32 to vector<1x128xi32>
      %35 = arith.cmpi eq, %31, %34 : vector<1x128xi32>
      %cst_22 = arith.constant 0.000000e+00 : f32
      %36 = vector.broadcast %30 : f32 to vector<1x128xf32>
      %37 = vector.broadcast %cst_22 : f32 to vector<1x128xf32>
      %38 = arith.select %35, %36, %37 : vector<1x128xi1>, vector<1x128xf32>
      %39 = vector.broadcast %25 : f32 to vector<1x128xf32>
      %40 = arith.select %33, %39, %38 : vector<1x128xi1>, vector<1x128xf32>
      %c0_23 = arith.constant 0 : index
      %c0_24 = arith.constant 0 : index
      %41 = vector.load %arg4[%c0_23, %c0_24] : memref<1x128xf32, #tpu.memory_space<vmem>>, vector<1x128xf32>
      tpu.vector_store %arg4[%c0_23, %c0_24], %40 {strides = array<i32>} : memref<1x128xf32, #tpu.memory_space<vmem>>, vector<1x128xf32>,
    } else {
    }
    return
  }
  func.func @transform_0(%arg0: i32, %arg1: i32) -> (i32, i32) {
    %c1_i32 = arith.constant 1 : i32
    %0 = arith.muli %arg0, %c1_i32 : i32
    %1 = arith.addi %0, %arg1 : i32
    %c0_i32 = arith.constant 0 : i32
    %c0_i32_0 = arith.constant 0 : i32
    return %1, %c0_i32 : i32, i32
  }
  func.func @transform_1(%arg0: i32, %arg1: i32) -> (i32, i32) {
    %c1_i32 = arith.constant 1 : i32
    %0 = arith.muli %arg0, %c1_i32 : i32
    %1 = arith.addi %0, %arg1 : i32
    %c0_i32 = arith.constant 0 : i32
    %c0_i32_0 = arith.constant 0 : i32
    return %1, %c0_i32 : i32, i32
  }
  func.func @transform_2(%arg0: i32, %arg1: i32) -> (i32, i32) {
    %c0_i32 = arith.constant 0 : i32
    %c0_i32_0 = arith.constant 0 : i32
    return %c0_i32, %arg0 : i32, i32
  }
}

</mosaic_0001>

<llo_original>
// kernel: tpu_custom_call.1
$region0: #{tpu_custom_call.1}
  #allocation0 [shape = 'u32[]', space=smem, size = 0x4, offset = 0x4, fixed_abs, tag = 'smem constant byte address 0x4 - core index']
  #allocation1 [shape = 'u32[144,128]{1,0:T(1,128)}', space=vmem, size = 0x12000, scoped, tag = 'internal scratch']
  #allocation2 [shape = 'f32[1,128]{1,0:T(1,128)}', space=vmem, size = 0x200, scoped, tag = 'scratch operand']
  #allocation3 [shape = 'f32[1,128]{1,0:T(1,128)}', space=vmem, size = 0x200, scoped, tag = 'scratch operand']
  %s0 = inlined_call_operand.hbm [shape: f32[16,128], index: 0, kind: input, shape index: {}]
  %s1 = inlined_call_operand.hbm [shape: f32[16,128], index: 1, kind: input, shape index: {}]
  %s2 = inlined_call_operand.hbm [shape: f32[1,128], index: 2, kind: output, shape index: {}]
  %s3 = sld [smem:[#allocation0]]
  $region34: #{tpu_custom_call.1} parent=0
    _
  %s5 = ssub.s32 1, %s3
  %s6 = scalar_select 0, %s5, %s3
  $region1: #{tpu_custom_call.1} parent=0
    #allocation4 [shape = 'u8[8192]{0}', space=vmem, size = 0x2000, scoped, tag = 'input window, operand 0, single buffered']
    #allocation5 [shape = 's32[1]{0}', space=sflag, size = 0x4, scoped, tag = 'scoped memory for tpu_custom_call.1']
    #allocation6 [shape = 's32[1]{0}', space=sflag, size = 0x4, scoped, tag = 'scoped memory for tpu_custom_call.1']
    #allocation7 [shape = 'u8[8192]{0}', space=vmem, size = 0x2000, scoped, tag = 'input window, operand 1, single buffered']
    #allocation8 [shape = 's32[1]{0}', space=sflag, size = 0x4, scoped, tag = 'scoped memory for tpu_custom_call.1']
    #allocation9 [shape = 'u8[512]{0}', space=vmem, size = 0x400, scoped, tag = 'output window, operand 0, single buffered']
    %7 = vsyncpa [#allocation5], 0
    %8 = vsyncpa [#allocation8], 0
    %9 = vsyncpa [#allocation6], 0
    // Predicated region
    $region2: #{tpu_custom_call.1} parent=1 // pred_check
      _
    $region3: #{tpu_custom_call.1} parent=1 // pred_check_branch
      %11 = sbr.rel (0) target = $region5
    $region4: #{tpu_custom_call.1} parent=1 // pred_region
      %s12 = sadd.s32 0, 0
      %s13 = smul.u32 2, %s12
      %s15 = ssub.s32 256, 256
      %16 = vsyncadd [#allocation5], %s15
      %s17 = smul.addr %s13, 128
      %s18 = scalar_lea.hbm %s0, %s17
      %s19 = sshll.u32 [#allocation4], 4
      %s20 = int_to_ptr.vmem [resolvable:$true] %s19
      %25 = dma.hbm_to_vmem [thread:$0]  %s18, 256, %s20, [#allocation5], 128, 128, 8
    $region5: #{tpu_custom_call.1} parent=1 // pred_fallthru
      _
    // Predicated region
    $region6: #{tpu_custom_call.1} parent=1 // pred_check
      _
    $region7: #{tpu_custom_call.1} parent=1 // pred_check_branch
      %27 = sbr.rel (0) target = $region9
    $region8: #{tpu_custom_call.1} parent=1 // pred_region
      %s28 = sadd.s32 0, 0
      %s29 = smul.u32 2, %s28
      %s31 = ssub.s32 256, 256
      %32 = vsyncadd [#allocation8], %s31
      %s33 = smul.addr %s29, 128
      %s34 = scalar_lea.hbm %s1, %s33
      %s35 = sshll.u32 [#allocation7], 4
      %s36 = int_to_ptr.vmem [resolvable:$true] %s35
      %41 = dma.hbm_to_vmem [thread:$0]  %s34, 256, %s36, [#allocation8], 128, 128, 8
    $region9: #{tpu_custom_call.1} parent=1 // pred_fallthru
      _
    // Predicated region
    $region10: #{tpu_custom_call.1} parent=1 // pred_check
      _
    $region11: #{tpu_custom_call.1} parent=1 // pred_check_branch
      %43 = sbr.rel (0) target = $region13
    $region12: #{tpu_custom_call.1} parent=1 // pred_region
      %44 = dma.done [#allocation5], 256
    $region13: #{tpu_custom_call.1} parent=1 // pred_fallthru
      _
    // Predicated region
    $region14: #{tpu_custom_call.1} parent=1 // pred_check
      _
    $region15: #{tpu_custom_call.1} parent=1 // pred_check_branch
      %46 = sbr.rel (0) target = $region17
    $region16: #{tpu_custom_call.1} parent=1 // pred_region
      %47 = dma.done [#allocation8], 256
    $region17: #{tpu_custom_call.1} parent=1 // pred_fallthru
      _
    %s48 = sadd.s32 0, 0
    %s49 = smul.u32 2, %s48
    %s50 = sadd.s32 0, 0
    %s51 = smul.u32 2, %s50
    %p52 = scmp.eq.s32.totalorder 0, 0
    // Predicated region
    $region18: #{tpu_custom_call.1} parent=1 // pred_check
      %p53 = pneg %p52
    $region19: #{tpu_custom_call.1} parent=1 // pred_check_branch
      %55 = sbr.rel (%p53) target = $region21
    $region20: #{tpu_custom_call.1} parent=1 // pred_region
      %56 = vst [vmem:[#allocation2] sm:$0x1] 0.0
      %57 = vst [vmem:[#allocation3] sm:$0x1] 0.0
    $region21: #{tpu_custom_call.1} parent=1 // pred_fallthru
      _
    %v58 = vld [vmem:[#allocation4] sm:$0xff]
    %v59 = vld [vmem:[#allocation4 + $0x8] sm:$0xff]
    %v60 = vld [vmem:[#allocation7] sm:$0xff]
    %v61 = vld [vmem:[#allocation7 + $0x8] sm:$0xff]
    %v62 = vsub.f32 %v58, %v60
    %v63 = vsub.f32 %v59, %v61
    %v64 = vld [vmem:[#allocation2] sm:$0x1]
    %v65 = vmul.f32 %v62, %v62
    %v66 = vmul.f32 %v63, %v63
    %v67 = vadd.f32 %v65, %v66
    %v68 = vrot.slane %v67, 4
    %v69 = vadd.f32 %v67, %v68
    %v70 = vrot.slane %v69, 2
    %v71 = vadd.f32 %v69, %v70
    %v72 = vrot.slane %v71, 1
    %v73 = vadd.f32 %v71, %v72
    %v74 = vadd.f32 %v64, %v73
    %75 = vst [vmem:[#allocation2] sm:$0x1] %v74
    %v76 = vld [vmem:[#allocation3] sm:$0x1]
    %v77 = vmul.f32 %v60, %v60
    %v78 = vmul.f32 %v61, %v61
    %v79 = vadd.f32 %v77, %v78
    %v80 = vrot.slane %v79, 4
    %v81 = vadd.f32 %v79, %v80
    %v82 = vrot.slane %v81, 2
    %v83 = vadd.f32 %v81, %v82
    %v84 = vrot.slane %v83, 1
    %v85 = vadd.f32 %v83, %v84
    %v86 = vadd.f32 %v76, %v85
    %87 = vst [vmem:[#allocation3] sm:$0x1] %v86
    // Predicated region
    $region22: #{tpu_custom_call.1} parent=1 // pred_check
      %p88 = pneg %p52
    $region23: #{tpu_custom_call.1} parent=1 // pred_check_branch
      %90 = sbr.rel (%p88) target = $region25
    $region24: #{tpu_custom_call.1} parent=1 // pred_region
      %v91 = vld [vmem:[#allocation2] sm:$0x1]
      %vm92 = vcmask 1040384
      %v93 = vsel %vm92, %v91, 0.0
      %94 = vadd.xlane.f32.xlu0 %v93
      %v95 = vpop.xlane.xlu0 %94
      %v96 = vrot.slane %v95, 4
      %v97 = vadd.f32 %v95, %v96
      %v98 = vrot.slane %v97, 2
      %v99 = vadd.f32 %v97, %v98
      %v100 = vrot.slane %v99, 1
      %v101 = vadd.f32 %v99, %v100
      %s102 = vtos %v101
      %v103 = vld [vmem:[#allocation3] sm:$0x1]
      %v104 = vsel %vm92, %v103, 0.0
      %105 = vadd.xlane.f32.xlu0 %v104
      %v106 = vpop.xlane.xlu0 %105
      %v107 = vrot.slane %v106, 4
      %v108 = vadd.f32 %v106, %v107
      %v109 = vrot.slane %v108, 2
      %v110 = vadd.f32 %v108, %v109
      %v111 = vrot.slane %v110, 1
      %v112 = vadd.f32 %v110, %v111
      %s113 = vtos %v112
      %v114 = vlaneseq
      %v115 = vand.u32 %v114, 127
      %vm116 = vcmp.eq.s32.totalorder %v115, 0
      %vm117 = vcmp.eq.s32.totalorder %v115, 1
      %v118 = vstv %s113
      %v119 = vsel %vm117, %v118, 0.0
      %v120 = vstv %s102
      %v121 = vsel %vm116, %v120, %v119
      %122 = vst [vmem:[#allocation9] sm:$0x1] %v121
    $region25: #{tpu_custom_call.1} parent=1 // pred_fallthru
      _
    // Predicated region
    $region26: #{tpu_custom_call.1} parent=1 // pred_check
      _
    $region27: #{tpu_custom_call.1} parent=1 // pred_check_branch
      %124 = sbr.rel (0) target = $region29
    $region28: #{tpu_custom_call.1} parent=1 // pred_region
      %s126 = ssub.s32 16, 16
      %127 = vsyncadd [#allocation6], %s126
      %s129 = sshll.u32 [#allocation9], 4
      %s130 = int_to_ptr.vmem [resolvable:$true] %s129
      %132 = dma.vmem_to_hbm [thread:$0]  %s130, 16, %s2, [#allocation6]
    $region29: #{tpu_custom_call.1} parent=1 // pred_fallthru
      _
    // Predicated region
    $region30: #{tpu_custom_call.1} parent=1 // pred_check
      _
    $region31: #{tpu_custom_call.1} parent=1 // pred_check_branch
      %134 = sbr.rel (0) target = $region33
    $region32: #{tpu_custom_call.1} parent=1 // pred_region
      %135 = dma.done [#allocation6], 16
    $region33: #{tpu_custom_call.1} parent=1 // pred_fallthru
      _
    %136 = vsyncpa [#allocation5], 1
    %137 = vsyncpa [#allocation8], 1
    %138 = vsyncpa [#allocation6], 1

</llo_original>
